<compile_context>
chip_gen: v5e
topology: v5e:2x2
jax: 0.10.0
libtpu: 0.0.40
codegen_flags: <defaults>
</compile_context>

<pallas_src>
import functools

import jax
import jax.numpy as jnp
import numpy as np
from jax.experimental import pallas as pl
from jax.experimental.pallas import tpu as pltpu


def mha_kernel(x_ref, wqkv_ref, pw_ref, pb_ref, o_ref, heads_ref, *,
               n_head, head_size, seq_len):
    """One grid step handles `batch_block` batch elements, all heads inside.

    x_ref:     (Bt*T, C)  bf16 activations (flattened batch x seq rows)
    wqkv_ref:  (C, 3C)    bf16 fused [Q|K|V] weights, scale folded into Q
    pw_ref:    (C, Cp)    bf16 output projection (W.T), zero-padded to Cp
    pb_ref:    (1, Cp)    f32  output projection bias, zero-padded
    o_ref:     (Bt*T, Cp) output block (lane-dense, Cp multiple of 128)
    heads_ref: (Bt*T, C)  f32 VMEM scratch holding concatenated head outputs
    """
    BtT, C = x_ref.shape
    T = seq_len
    Bt = BtT // T
    hs = head_size

    # ONE fused QKV projection for the whole block (bf16 in, f32 accumulate).
    qkv = jnp.dot(x_ref[...], wqkv_ref[...],
                  preferred_element_type=jnp.float32)          # (Bt*T, 3C)

    # Causal mask built in-kernel (iota + compare; no HBM mask, no (T,T) DMA).
    row = jax.lax.broadcasted_iota(jnp.int32, (T, T), 0)
    col = jax.lax.broadcasted_iota(jnp.int32, (T, T), 1)
    causal = col <= row
    neg_big = jnp.float32(-1e30)   # large finite negative (robust vs -inf)

    # Per-(batch-element, head) attention; each head's context goes straight
    # into the scratch at its concat column offset (no jnp.concatenate).
    for bt in range(Bt):           # static python loop; Bt is small here
        r0 = bt * T
        for h in range(n_head):    # static loop over heads
            q = qkv[r0:r0 + T, h * hs:(h + 1) * hs]                   # scaled
            k = qkv[r0:r0 + T, C + h * hs:C + (h + 1) * hs]
            v = qkv[r0:r0 + T, 2 * C + h * hs:2 * C + (h + 1) * hs]

            wei = jnp.dot(q, k.T, preferred_element_type=jnp.float32)  # (T, T)
            wei = jnp.where(causal, wei, neg_big)
            wei = wei - jnp.max(wei, axis=-1, keepdims=True)
            p = jnp.exp(wei)
            p = p * pl.reciprocal(jnp.sum(p, axis=-1, keepdims=True),
                                  approx=True)
            # attention dropout -> identity (inference)

            heads_ref[r0:r0 + T, h * hs:(h + 1) * hs] = jnp.dot(
                p, v, preferred_element_type=jnp.float32)              # (T, hs)

    # ONE wide output projection + bias for the whole block; the bias
    # broadcast happens once (outside all loops).
    out = jnp.dot(heads_ref[...].astype(pw_ref.dtype), pw_ref[...],
                  preferred_element_type=jnp.float32) + pb_ref[...]
    # output dropout -> identity (inference)
    o_ref[...] = out.astype(o_ref.dtype)


def _default_batch_block(B: int) -> int:
    """Generation-aware batch-block heuristic.

    Multi-TensorCore chips (v4/v5p megacore, v7x) want >=2 parallel grid steps
    so both cores get work; single-TC chips (v5e/v6e) want one big block since
    extra grid steps are pure per-step overhead at these shapes.
    """
    try:
        kind = jax.devices()[0].device_kind.lower()
    except Exception:
        kind = ""
    multi_tc = any(tag in kind for tag in ("v4", "v5p", "v7", "7x", "tpu7"))
    if multi_tc and B >= 2:
        # Largest divisor of B that still leaves >= 2 grid steps.
        return max(d for d in range(1, B // 2 + 1) if B % d == 0)
    return B


def multi_head_attention(x, wq, wk, wv, proj_w_t, proj_b, *, batch_block=None):
    """x: (B, T, C); wq/wk/wv: (n_head, C, head_size) (pre-transposed);
    proj_w_t: (C, C) = W_proj.T; proj_b: (C,)."""
    B, T, C = x.shape
    n_head, _, hs = wq.shape
    assert n_head * hs == C

    scale = C ** (-0.5)            # module scales by n_embd**-0.5 (as written)

    # Fuse per-head Q/K/V weights into one (C, 3C) matrix, heads in concat
    # order, softmax scale folded into Q columns; bf16 at the matmul boundary.
    wq_f = jnp.transpose(wq, (1, 0, 2)).reshape(C, C) * scale
    wk_f = jnp.transpose(wk, (1, 0, 2)).reshape(C, C)
    wv_f = jnp.transpose(wv, (1, 0, 2)).reshape(C, C)
    w_qkv = jnp.concatenate([wq_f, wk_f, wv_f], axis=-1).astype(jnp.bfloat16)

    # Pad the output channel dim to a lane-dense multiple of 128 so every
    # output store is an unmasked 128-wide vst; sliced back to C below.
    Cp = max(128, ((C + 127) // 128) * 128)
    pw_pad = jnp.pad(proj_w_t, ((0, 0), (0, Cp - C))).astype(jnp.bfloat16)
    pb_pad = jnp.pad(proj_b.reshape(1, C), ((0, 0), (0, Cp - C)))  # f32

    x2d = x.reshape(B * T, C).astype(jnp.bfloat16)   # free metadata reshape

    if batch_block is None:
        batch_block = _default_batch_block(B)
    assert B % batch_block == 0
    grid = (B // batch_block,)
    BtT = batch_block * T

    # Rough per-step VMEM estimate (double-buffered x/out blocks, single-
    # buffered weights, f32 head scratch + the qkv intermediate); only raise
    # the scoped limit (16 MiB v5e / 32 MiB v6e+v7x defaults) when needed.
    est_bytes = (2 * BtT * C * 2          # x block, bf16, 2 buffers
                 + 2 * BtT * Cp * 4       # out block, f32, 2 buffers
                 + C * 3 * C * 2          # fused QKV weight, bf16, 1 buffer
                 + C * Cp * 2 + Cp * 4    # proj weight (bf16) + bias (f32)
                 + BtT * C * 4            # head-output scratch, f32
                 + BtT * 3 * C * 4)       # qkv live value, f32
    vmem_limit = (min(100 * 1024 * 1024, 2 * est_bytes)
                  if est_bytes > 12 * 1024 * 1024 else None)

    kernel = functools.partial(mha_kernel, n_head=n_head, head_size=hs,
                               seq_len=T)

    out2d = pl.pallas_call(
        kernel,
        out_shape=jax.ShapeDtypeStruct((B * T, Cp), x.dtype),
        grid_spec=pltpu.PrefetchScalarGridSpec(
            num_scalar_prefetch=0,
            grid=grid,
            in_specs=[
                pl.BlockSpec((BtT, C), lambda b: (b, 0)),           # x rows
                pl.BlockSpec((C, 3 * C), lambda b: (0, 0),
                             pipeline_mode=pl.Buffered(1)),         # fused QKV
                pl.BlockSpec((C, Cp), lambda b: (0, 0),
                             pipeline_mode=pl.Buffered(1)),         # proj W.T
                pl.BlockSpec((1, Cp), lambda b: (0, 0),
                             pipeline_mode=pl.Buffered(1)),         # proj bias
            ],
            out_specs=pl.BlockSpec((BtT, Cp), lambda b: (b, 0)),
            scratch_shapes=[pltpu.VMEM((BtT, C), jnp.float32)],
        ),
        compiler_params=pltpu.CompilerParams(
            dimension_semantics=("parallel",),
            vmem_limit_bytes=vmem_limit),
    )(x2d, w_qkv, pw_pad, pb_pad)

    return out2d.reshape(B, T, Cp)[..., :C]


def reference(x, wq, wk, wv, tril, proj_w_t, proj_b):
    """Pure-JAX reference reproducing the PyTorch forward (eval mode)."""
    B, T, C = x.shape
    scale = C ** (-0.5)
    outs = []
    for h in range(wq.shape[0]):
        q = x @ wq[h]
        k = x @ wk[h]
        v = x @ wv[h]
        wei = (q @ jnp.swapaxes(k, -2, -1)) * scale
        wei = jnp.where(tril == 0.0, -jnp.inf, wei)
        wei = jax.nn.softmax(wei, axis=-1)
        outs.append(wei @ v)
    cat = jnp.concatenate(outs, axis=-1)
    return cat @ proj_w_t + proj_b


if __name__ == "__main__":
    # Small, module-consistent shapes.
    B, T = 2, 8                 # batch, sequence length (== block_size)
    n_embd = 32
    n_head = 4
    head_size = n_embd // n_head
    block_size = T

    key = jax.random.PRNGKey(0)
    kx, kq, kk, kv, kpw, kpb = jax.random.split(key, 6)

    x = jax.random.normal(kx, (B, T, n_embd), dtype=jnp.float32)

    # Per-head weights, stacked and pre-transposed: (n_head, n_embd, head_size)
    wq = 0.1 * jax.random.normal(kq, (n_head, n_embd, head_size), dtype=jnp.float32)
    wk = 0.1 * jax.random.normal(kk, (n_head, n_embd, head_size), dtype=jnp.float32)
    wv = 0.1 * jax.random.normal(kv, (n_head, n_embd, head_size), dtype=jnp.float32)

    # Output projection (PyTorch Linear: y = x @ W.T + b) -> pass W.T directly.
    proj_w_t = 0.1 * jax.random.normal(kpw, (n_embd, n_embd), dtype=jnp.float32)
    proj_b = 0.1 * jax.random.normal(kpb, (n_embd,), dtype=jnp.float32)

    out = multi_head_attention(x, wq, wk, wv, proj_w_t, proj_b)
    out = jax.block_until_ready(out)

    tril = jnp.tril(jnp.ones((block_size, block_size), dtype=jnp.float32))
    ref = reference(x, wq, wk, wv, tril, proj_w_t, proj_b)
    # Tolerance covers bf16 matmul-boundary casts + the EUP approximate
    # reciprocal in the softmax denominator.
    np.testing.assert_allclose(np.asarray(out), np.asarray(ref),
                               atol=5e-3, rtol=1e-2)

    print("KERNEL_OK")
</pallas_src>

<mosaic_0001>
module attributes {stable_mosaic.version = 11 : i64} {
  func.func @mha_kernel(%arg0: i32, %arg1: memref<16x32xbf16, #tpu.memory_space<vmem>>, %arg2: memref<32x96xbf16, #tpu.memory_space<vmem>>, %arg3: memref<32x128xbf16, #tpu.memory_space<vmem>>, %arg4: memref<1x128xf32, #tpu.memory_space<vmem>>, %arg5: memref<16x128xf32, #tpu.memory_space<vmem>>, %arg6: memref<16x32xf32, #tpu.memory_space<vmem>>) attributes {dimension_semantics = [#tpu.dimension_semantics<parallel>], iteration_bounds = array<i64: 1>, scalar_prefetch = 0 : i64, scratch_operands = 1 : i64, tpu.core_type = #tpu.core_type<tc>, window_params = [{transform_indices = @transform_0, window_bounds = array<i64: 16, 32>}, {pipeline_mode = #tpu.pipeline_mode<synchronous>, transform_indices = @transform_1, window_bounds = array<i64: 32, 96>}, {pipeline_mode = #tpu.pipeline_mode<synchronous>, transform_indices = @transform_2, window_bounds = array<i64: 32, 128>}, {pipeline_mode = #tpu.pipeline_mode<synchronous>, transform_indices = @transform_3, window_bounds = array<i64: 1, 128>}, {transform_indices = @transform_4, window_bounds = array<i64: 16, 128>}]} {
    %c0 = arith.constant 0 : index
    %c0_0 = arith.constant 0 : index
    %0 = vector.load %arg1[%c0, %c0_0] : memref<16x32xbf16, #tpu.memory_space<vmem>>, vector<16x32xbf16>
    %c0_1 = arith.constant 0 : index
    %c0_2 = arith.constant 0 : index
    %1 = vector.load %arg2[%c0_1, %c0_2] : memref<32x96xbf16, #tpu.memory_space<vmem>>, vector<32x96xbf16>
    %cst = arith.constant dense<0.000000e+00> : vector<16x96xf32>
    %2 = tpu.matmul %0, %1, %cst {dimension_numbers = #tpu.dot_dimension_numbers<[1], [0], [0], [1], [0, 0, 1, 1], [], []>} : vector<16x32xbf16>, vector<32x96xbf16>, vector<16x96xf32> -> vector<16x96xf32>
    %3 = tpu.iota {dimensions = array<i32: 0>} : vector<8x8xi32>
    %4 = tpu.iota {dimensions = array<i32: 1>} : vector<8x8xi32>
    %5 = arith.cmpi sle, %4, %3 : vector<8x8xi32>
    %6 = vector.extract_strided_slice %2 {offsets = [0, 0], sizes = [8, 8], strides = [1, 1]} : vector<16x96xf32> to vector<8x8xf32>
    %7 = vector.extract_strided_slice %2 {offsets = [0, 32], sizes = [8, 8], strides = [1, 1]} : vector<16x96xf32> to vector<8x8xf32>
    %8 = vector.extract_strided_slice %2 {offsets = [0, 64], sizes = [8, 8], strides = [1, 1]} : vector<16x96xf32> to vector<8x8xf32>
    %9 = tpu.transpose %7, [1, 0] : vector<8x8xf32> -> vector<8x8xf32>
    %cst_3 = arith.constant dense<0.000000e+00> : vector<8x8xf32>
    %10 = tpu.matmul %6, %9, %cst_3 {dimension_numbers = #tpu.dot_dimension_numbers<[1], [0], [0], [1], [0, 0, 1, 1], [], []>} : vector<8x8xf32>, vector<8x8xf32>, vector<8x8xf32> -> vector<8x8xf32>
    %cst_4 = arith.constant -1.000000e+30 : f32
    %11 = vector.broadcast %cst_4 : f32 to vector<8x8xf32>
    %12 = arith.select %5, %10, %11 : vector<8x8xi1>, vector<8x8xf32>
    %cst_5 = arith.constant dense<0xFF800000> : vector<8xf32>
    %13 = vector.multi_reduction <maximumf>, %12, %cst_5 [1] : vector<8x8xf32> to vector<8xf32>
    %14 = vector.shape_cast %13 : vector<8xf32> to vector<8x1xf32>
    %15 = vector.broadcast %14 : vector<8x1xf32> to vector<8x8xf32>
    %16 = arith.subf %12, %15 : vector<8x8xf32>
    %17 = math.exp %16 : vector<8x8xf32>
    %cst_6 = arith.constant dense<0.000000e+00> : vector<8xf32>
    %18 = vector.multi_reduction <add>, %17, %cst_6 [1] : vector<8x8xf32> to vector<8xf32>
    %19 = vector.shape_cast %18 : vector<8xf32> to vector<8x1xf32>
    %20 = tpu.reciprocal %19 {approx = true} : vector<8x1xf32> -> vector<8x1xf32>
    %21 = vector.broadcast %20 : vector<8x1xf32> to vector<8x8xf32>
    %22 = arith.mulf %17, %21 : vector<8x8xf32>
    %cst_7 = arith.constant dense<0.000000e+00> : vector<8x8xf32>
    %23 = tpu.matmul %22, %8, %cst_7 {dimension_numbers = #tpu.dot_dimension_numbers<[1], [0], [0], [1], [0, 0, 1, 1], [], []>} : vector<8x8xf32>, vector<8x8xf32>, vector<8x8xf32> -> vector<8x8xf32>
    %c0_8 = arith.constant 0 : index
    %c0_9 = arith.constant 0 : index
    %24 = vector.load %arg6[%c0_8, %c0_9] : memref<16x32xf32, #tpu.memory_space<vmem>>, vector<8x8xf32>
    tpu.vector_store %arg6[%c0_8, %c0_9], %23 {strides = array<i32>} : memref<16x32xf32, #tpu.memory_space<vmem>>, vector<8x8xf32>,
    %25 = vector.extract_strided_slice %2 {offsets = [0, 8], sizes = [8, 8], strides = [1, 1]} : vector<16x96xf32> to vector<8x8xf32>
    %26 = vector.extract_strided_slice %2 {offsets = [0, 40], sizes = [8, 8], strides = [1, 1]} : vector<16x96xf32> to vector<8x8xf32>
    %27 = vector.extract_strided_slice %2 {offsets = [0, 72], sizes = [8, 8], strides = [1, 1]} : vector<16x96xf32> to vector<8x8xf32>
    %28 = tpu.transpose %26, [1, 0] : vector<8x8xf32> -> vector<8x8xf32>
    %cst_10 = arith.constant dense<0.000000e+00> : vector<8x8xf32>
    %29 = tpu.matmul %25, %28, %cst_10 {dimension_numbers = #tpu.dot_dimension_numbers<[1], [0], [0], [1], [0, 0, 1, 1], [], []>} : vector<8x8xf32>, vector<8x8xf32>, vector<8x8xf32> -> vector<8x8xf32>
    %cst_11 = arith.constant -1.000000e+30 : f32
    %30 = vector.broadcast %cst_11 : f32 to vector<8x8xf32>
    %31 = arith.select %5, %29, %30 : vector<8x8xi1>, vector<8x8xf32>
    %cst_12 = arith.constant dense<0xFF800000> : vector<8xf32>
    %32 = vector.multi_reduction <maximumf>, %31, %cst_12 [1] : vector<8x8xf32> to vector<8xf32>
    %33 = vector.shape_cast %32 : vector<8xf32> to vector<8x1xf32>
    %34 = vector.broadcast %33 : vector<8x1xf32> to vector<8x8xf32>
    %35 = arith.subf %31, %34 : vector<8x8xf32>
    %36 = math.exp %35 : vector<8x8xf32>
    %cst_13 = arith.constant dense<0.000000e+00> : vector<8xf32>
    %37 = vector.multi_reduction <add>, %36, %cst_13 [1] : vector<8x8xf32> to vector<8xf32>
    %38 = vector.shape_cast %37 : vector<8xf32> to vector<8x1xf32>
    %39 = tpu.reciprocal %38 {approx = true} : vector<8x1xf32> -> vector<8x1xf32>
    %40 = vector.broadcast %39 : vector<8x1xf32> to vector<8x8xf32>
    %41 = arith.mulf %36, %40 : vector<8x8xf32>
    %cst_14 = arith.constant dense<0.000000e+00> : vector<8x8xf32>
    %42 = tpu.matmul %41, %27, %cst_14 {dimension_numbers = #tpu.dot_dimension_numbers<[1], [0], [0], [1], [0, 0, 1, 1], [], []>} : vector<8x8xf32>, vector<8x8xf32>, vector<8x8xf32> -> vector<8x8xf32>
    %c0_15 = arith.constant 0 : index
    %c8 = arith.constant 8 : index
    %43 = vector.load %arg6[%c0_15, %c8] : memref<16x32xf32, #tpu.memory_space<vmem>>, vector<8x8xf32>
    tpu.vector_store %arg6[%c0_15, %c8], %42 {strides = array<i32>} : memref<16x32xf32, #tpu.memory_space<vmem>>, vector<8x8xf32>,
    %44 = vector.extract_strided_slice %2 {offsets = [0, 16], sizes = [8, 8], strides = [1, 1]} : vector<16x96xf32> to vector<8x8xf32>
    %45 = vector.extract_strided_slice %2 {offsets = [0, 48], sizes = [8, 8], strides = [1, 1]} : vector<16x96xf32> to vector<8x8xf32>
    %46 = vector.extract_strided_slice %2 {offsets = [0, 80], sizes = [8, 8], strides = [1, 1]} : vector<16x96xf32> to vector<8x8xf32>
    %47 = tpu.transpose %45, [1, 0] : vector<8x8xf32> -> vector<8x8xf32>
    %cst_16 = arith.constant dense<0.000000e+00> : vector<8x8xf32>
    %48 = tpu.matmul %44, %47, %cst_16 {dimension_numbers = #tpu.dot_dimension_numbers<[1], [0], [0], [1], [0, 0, 1, 1], [], []>} : vector<8x8xf32>, vector<8x8xf32>, vector<8x8xf32> -> vector<8x8xf32>
    %cst_17 = arith.constant -1.000000e+30 : f32
    %49 = vector.broadcast %cst_17 : f32 to vector<8x8xf32>
    %50 = arith.select %5, %48, %49 : vector<8x8xi1>, vector<8x8xf32>
    %cst_18 = arith.constant dense<0xFF800000> : vector<8xf32>
    %51 = vector.multi_reduction <maximumf>, %50, %cst_18 [1] : vector<8x8xf32> to vector<8xf32>
    %52 = vector.shape_cast %51 : vector<8xf32> to vector<8x1xf32>
    %53 = vector.broadcast %52 : vector<8x1xf32> to vector<8x8xf32>
    %54 = arith.subf %50, %53 : vector<8x8xf32>
    %55 = math.exp %54 : vector<8x8xf32>
    %cst_19 = arith.constant dense<0.000000e+00> : vector<8xf32>
    %56 = vector.multi_reduction <add>, %55, %cst_19 [1] : vector<8x8xf32> to vector<8xf32>
    %57 = vector.shape_cast %56 : vector<8xf32> to vector<8x1xf32>
    %58 = tpu.reciprocal %57 {approx = true} : vector<8x1xf32> -> vector<8x1xf32>
    %59 = vector.broadcast %58 : vector<8x1xf32> to vector<8x8xf32>
    %60 = arith.mulf %55, %59 : vector<8x8xf32>
    %cst_20 = arith.constant dense<0.000000e+00> : vector<8x8xf32>
    %61 = tpu.matmul %60, %46, %cst_20 {dimension_numbers = #tpu.dot_dimension_numbers<[1], [0], [0], [1], [0, 0, 1, 1], [], []>} : vector<8x8xf32>, vector<8x8xf32>, vector<8x8xf32> -> vector<8x8xf32>
    %c0_21 = arith.constant 0 : index
    %c16 = arith.constant 16 : index
    %62 = vector.load %arg6[%c0_21, %c16] : memref<16x32xf32, #tpu.memory_space<vmem>>, vector<8x8xf32>
    tpu.vector_store %arg6[%c0_21, %c16], %61 {strides = array<i32>} : memref<16x32xf32, #tpu.memory_space<vmem>>, vector<8x8xf32>,
    %63 = vector.extract_strided_slice %2 {offsets = [0, 24], sizes = [8, 8], strides = [1, 1]} : vector<16x96xf32> to vector<8x8xf32>
    %64 = vector.extract_strided_slice %2 {offsets = [0, 56], sizes = [8, 8], strides = [1, 1]} : vector<16x96xf32> to vector<8x8xf32>
    %65 = vector.extract_strided_slice %2 {offsets = [0, 88], sizes = [8, 8], strides = [1, 1]} : vector<16x96xf32> to vector<8x8xf32>
    %66 = tpu.transpose %64, [1, 0] : vector<8x8xf32> -> vector<8x8xf32>
    %cst_22 = arith.constant dense<0.000000e+00> : vector<8x8xf32>
    %67 = tpu.matmul %63, %66, %cst_22 {dimension_numbers = #tpu.dot_dimension_numbers<[1], [0], [0], [1], [0, 0, 1, 1], [], []>} : vector<8x8xf32>, vector<8x8xf32>, vector<8x8xf32> -> vector<8x8xf32>
    %cst_23 = arith.constant -1.000000e+30 : f32
    %68 = vector.broadcast %cst_23 : f32 to vector<8x8xf32>
    %69 = arith.select %5, %67, %68 : vector<8x8xi1>, vector<8x8xf32>
    %cst_24 = arith.constant dense<0xFF800000> : vector<8xf32>
    %70 = vector.multi_reduction <maximumf>, %69, %cst_24 [1] : vector<8x8xf32> to vector<8xf32>
    %71 = vector.shape_cast %70 : vector<8xf32> to vector<8x1xf32>
    %72 = vector.broadcast %71 : vector<8x1xf32> to vector<8x8xf32>
    %73 = arith.subf %69, %72 : vector<8x8xf32>
    %74 = math.exp %73 : vector<8x8xf32>
    %cst_25 = arith.constant dense<0.000000e+00> : vector<8xf32>
    %75 = vector.multi_reduction <add>, %74, %cst_25 [1] : vector<8x8xf32> to vector<8xf32>
    %76 = vector.shape_cast %75 : vector<8xf32> to vector<8x1xf32>
    %77 = tpu.reciprocal %76 {approx = true} : vector<8x1xf32> -> vector<8x1xf32>
    %78 = vector.broadcast %77 : vector<8x1xf32> to vector<8x8xf32>
    %79 = arith.mulf %74, %78 : vector<8x8xf32>
    %cst_26 = arith.constant dense<0.000000e+00> : vector<8x8xf32>
    %80 = tpu.matmul %79, %65, %cst_26 {dimension_numbers = #tpu.dot_dimension_numbers<[1], [0], [0], [1], [0, 0, 1, 1], [], []>} : vector<8x8xf32>, vector<8x8xf32>, vector<8x8xf32> -> vector<8x8xf32>
    %c0_27 = arith.constant 0 : index
    %c24 = arith.constant 24 : index
    %81 = vector.load %arg6[%c0_27, %c24] : memref<16x32xf32, #tpu.memory_space<vmem>>, vector<8x8xf32>
    tpu.vector_store %arg6[%c0_27, %c24], %80 {strides = array<i32>} : memref<16x32xf32, #tpu.memory_space<vmem>>, vector<8x8xf32>,
    %82 = vector.extract_strided_slice %2 {offsets = [8, 0], sizes = [8, 8], strides = [1, 1]} : vector<16x96xf32> to vector<8x8xf32>
    %83 = vector.extract_strided_slice %2 {offsets = [8, 32], sizes = [8, 8], strides = [1, 1]} : vector<16x96xf32> to vector<8x8xf32>
    %84 = vector.extract_strided_slice %2 {offsets = [8, 64], sizes = [8, 8], strides = [1, 1]} : vector<16x96xf32> to vector<8x8xf32>
    %85 = tpu.transpose %83, [1, 0] : vector<8x8xf32> -> vector<8x8xf32>
    %cst_28 = arith.constant dense<0.000000e+00> : vector<8x8xf32>
    %86 = tpu.matmul %82, %85, %cst_28 {dimension_numbers = #tpu.dot_dimension_numbers<[1], [0], [0], [1], [0, 0, 1, 1], [], []>} : vector<8x8xf32>, vector<8x8xf32>, vector<8x8xf32> -> vector<8x8xf32>
    %cst_29 = arith.constant -1.000000e+30 : f32
    %87 = vector.broadcast %cst_29 : f32 to vector<8x8xf32>
    %88 = arith.select %5, %86, %87 : vector<8x8xi1>, vector<8x8xf32>
    %cst_30 = arith.constant dense<0xFF800000> : vector<8xf32>
    %89 = vector.multi_reduction <maximumf>, %88, %cst_30 [1] : vector<8x8xf32> to vector<8xf32>
    %90 = vector.shape_cast %89 : vector<8xf32> to vector<8x1xf32>
    %91 = vector.broadcast %90 : vector<8x1xf32> to vector<8x8xf32>
    %92 = arith.subf %88, %91 : vector<8x8xf32>
    %93 = math.exp %92 : vector<8x8xf32>
    %cst_31 = arith.constant dense<0.000000e+00> : vector<8xf32>
    %94 = vector.multi_reduction <add>, %93, %cst_31 [1] : vector<8x8xf32> to vector<8xf32>
    %95 = vector.shape_cast %94 : vector<8xf32> to vector<8x1xf32>
    %96 = tpu.reciprocal %95 {approx = true} : vector<8x1xf32> -> vector<8x1xf32>
    %97 = vector.broadcast %96 : vector<8x1xf32> to vector<8x8xf32>
    %98 = arith.mulf %93, %97 : vector<8x8xf32>
    %cst_32 = arith.constant dense<0.000000e+00> : vector<8x8xf32>
    %99 = tpu.matmul %98, %84, %cst_32 {dimension_numbers = #tpu.dot_dimension_numbers<[1], [0], [0], [1], [0, 0, 1, 1], [], []>} : vector<8x8xf32>, vector<8x8xf32>, vector<8x8xf32> -> vector<8x8xf32>
    %c8_33 = arith.constant 8 : index
    %c0_34 = arith.constant 0 : index
    %100 = vector.load %arg6[%c8_33, %c0_34] : memref<16x32xf32, #tpu.memory_space<vmem>>, vector<8x8xf32>
    tpu.vector_store %arg6[%c8_33, %c0_34], %99 {strides = array<i32>} : memref<16x32xf32, #tpu.memory_space<vmem>>, vector<8x8xf32>,
    %101 = vector.extract_strided_slice %2 {offsets = [8, 8], sizes = [8, 8], strides = [1, 1]} : vector<16x96xf32> to vector<8x8xf32>
    %102 = vector.extract_strided_slice %2 {offsets = [8, 40], sizes = [8, 8], strides = [1, 1]} : vector<16x96xf32> to vector<8x8xf32>
    %103 = vector.extract_strided_slice %2 {offsets = [8, 72], sizes = [8, 8], strides = [1, 1]} : vector<16x96xf32> to vector<8x8xf32>
    %104 = tpu.transpose %102, [1, 0] : vector<8x8xf32> -> vector<8x8xf32>
    %cst_35 = arith.constant dense<0.000000e+00> : vector<8x8xf32>
    %105 = tpu.matmul %101, %104, %cst_35 {dimension_numbers = #tpu.dot_dimension_numbers<[1], [0], [0], [1], [0, 0, 1, 1], [], []>} : vector<8x8xf32>, vector<8x8xf32>, vector<8x8xf32> -> vector<8x8xf32>
    %cst_36 = arith.constant -1.000000e+30 : f32
    %106 = vector.broadcast %cst_36 : f32 to vector<8x8xf32>
    %107 = arith.select %5, %105, %106 : vector<8x8xi1>, vector<8x8xf32>
    %cst_37 = arith.constant dense<0xFF800000> : vector<8xf32>
    %108 = vector.multi_reduction <maximumf>, %107, %cst_37 [1] : vector<8x8xf32> to vector<8xf32>
    %109 = vector.shape_cast %108 : vector<8xf32> to vector<8x1xf32>
    %110 = vector.broadcast %109 : vector<8x1xf32> to vector<8x8xf32>
    %111 = arith.subf %107, %110 : vector<8x8xf32>
    %112 = math.exp %111 : vector<8x8xf32>
    %cst_38 = arith.constant dense<0.000000e+00> : vector<8xf32>
    %113 = vector.multi_reduction <add>, %112, %cst_38 [1] : vector<8x8xf32> to vector<8xf32>
    %114 = vector.shape_cast %113 : vector<8xf32> to vector<8x1xf32>
    %115 = tpu.reciprocal %114 {approx = true} : vector<8x1xf32> -> vector<8x1xf32>
    %116 = vector.broadcast %115 : vector<8x1xf32> to vector<8x8xf32>
    %117 = arith.mulf %112, %116 : vector<8x8xf32>
    %cst_39 = arith.constant dense<0.000000e+00> : vector<8x8xf32>
    %118 = tpu.matmul %117, %103, %cst_39 {dimension_numbers = #tpu.dot_dimension_numbers<[1], [0], [0], [1], [0, 0, 1, 1], [], []>} : vector<8x8xf32>, vector<8x8xf32>, vector<8x8xf32> -> vector<8x8xf32>
    %c8_40 = arith.constant 8 : index
    %c8_41 = arith.constant 8 : index
    %119 = vector.load %arg6[%c8_40, %c8_41] : memref<16x32xf32, #tpu.memory_space<vmem>>, vector<8x8xf32>
    tpu.vector_store %arg6[%c8_40, %c8_41], %118 {strides = array<i32>} : memref<16x32xf32, #tpu.memory_space<vmem>>, vector<8x8xf32>,
    %120 = vector.extract_strided_slice %2 {offsets = [8, 16], sizes = [8, 8], strides = [1, 1]} : vector<16x96xf32> to vector<8x8xf32>
    %121 = vector.extract_strided_slice %2 {offsets = [8, 48], sizes = [8, 8], strides = [1, 1]} : vector<16x96xf32> to vector<8x8xf32>
    %122 = vector.extract_strided_slice %2 {offsets = [8, 80], sizes = [8, 8], strides = [1, 1]} : vector<16x96xf32> to vector<8x8xf32>
    %123 = tpu.transpose %121, [1, 0] : vector<8x8xf32> -> vector<8x8xf32>
    %cst_42 = arith.constant dense<0.000000e+00> : vector<8x8xf32>
    %124 = tpu.matmul %120, %123, %cst_42 {dimension_numbers = #tpu.dot_dimension_numbers<[1], [0], [0], [1], [0, 0, 1, 1], [], []>} : vector<8x8xf32>, vector<8x8xf32>, vector<8x8xf32> -> vector<8x8xf32>
    %cst_43 = arith.constant -1.000000e+30 : f32
    %125 = vector.broadcast %cst_43 : f32 to vector<8x8xf32>
    %126 = arith.select %5, %124, %125 : vector<8x8xi1>, vector<8x8xf32>
    %cst_44 = arith.constant dense<0xFF800000> : vector<8xf32>
    %127 = vector.multi_reduction <maximumf>, %126, %cst_44 [1] : vector<8x8xf32> to vector<8xf32>
    %128 = vector.shape_cast %127 : vector<8xf32> to vector<8x1xf32>
    %129 = vector.broadcast %128 : vector<8x1xf32> to vector<8x8xf32>
    %130 = arith.subf %126, %129 : vector<8x8xf32>
    %131 = math.exp %130 : vector<8x8xf32>
    %cst_45 = arith.constant dense<0.000000e+00> : vector<8xf32>
    %132 = vector.multi_reduction <add>, %131, %cst_45 [1] : vector<8x8xf32> to vector<8xf32>
    %133 = vector.shape_cast %132 : vector<8xf32> to vector<8x1xf32>
    %134 = tpu.reciprocal %133 {approx = true} : vector<8x1xf32> -> vector<8x1xf32>
    %135 = vector.broadcast %134 : vector<8x1xf32> to vector<8x8xf32>
    %136 = arith.mulf %131, %135 : vector<8x8xf32>
    %cst_46 = arith.constant dense<0.000000e+00> : vector<8x8xf32>
    %137 = tpu.matmul %136, %122, %cst_46 {dimension_numbers = #tpu.dot_dimension_numbers<[1], [0], [0], [1], [0, 0, 1, 1], [], []>} : vector<8x8xf32>, vector<8x8xf32>, vector<8x8xf32> -> vector<8x8xf32>
    %c8_47 = arith.constant 8 : index
    %c16_48 = arith.constant 16 : index
    %138 = vector.load %arg6[%c8_47, %c16_48] : memref<16x32xf32, #tpu.memory_space<vmem>>, vector<8x8xf32>
    tpu.vector_store %arg6[%c8_47, %c16_48], %137 {strides = array<i32>} : memref<16x32xf32, #tpu.memory_space<vmem>>, vector<8x8xf32>,
    %139 = vector.extract_strided_slice %2 {offsets = [8, 24], sizes = [8, 8], strides = [1, 1]} : vector<16x96xf32> to vector<8x8xf32>
    %140 = vector.extract_strided_slice %2 {offsets = [8, 56], sizes = [8, 8], strides = [1, 1]} : vector<16x96xf32> to vector<8x8xf32>
    %141 = vector.extract_strided_slice %2 {offsets = [8, 88], sizes = [8, 8], strides = [1, 1]} : vector<16x96xf32> to vector<8x8xf32>
    %142 = tpu.transpose %140, [1, 0] : vector<8x8xf32> -> vector<8x8xf32>
    %cst_49 = arith.constant dense<0.000000e+00> : vector<8x8xf32>
    %143 = tpu.matmul %139, %142, %cst_49 {dimension_numbers = #tpu.dot_dimension_numbers<[1], [0], [0], [1], [0, 0, 1, 1], [], []>} : vector<8x8xf32>, vector<8x8xf32>, vector<8x8xf32> -> vector<8x8xf32>
    %cst_50 = arith.constant -1.000000e+30 : f32
    %144 = vector.broadcast %cst_50 : f32 to vector<8x8xf32>
    %145 = arith.select %5, %143, %144 : vector<8x8xi1>, vector<8x8xf32>
    %cst_51 = arith.constant dense<0xFF800000> : vector<8xf32>
    %146 = vector.multi_reduction <maximumf>, %145, %cst_51 [1] : vector<8x8xf32> to vector<8xf32>
    %147 = vector.shape_cast %146 : vector<8xf32> to vector<8x1xf32>
    %148 = vector.broadcast %147 : vector<8x1xf32> to vector<8x8xf32>
    %149 = arith.subf %145, %148 : vector<8x8xf32>
    %150 = math.exp %149 : vector<8x8xf32>
    %cst_52 = arith.constant dense<0.000000e+00> : vector<8xf32>
    %151 = vector.multi_reduction <add>, %150, %cst_52 [1] : vector<8x8xf32> to vector<8xf32>
    %152 = vector.shape_cast %151 : vector<8xf32> to vector<8x1xf32>
    %153 = tpu.reciprocal %152 {approx = true} : vector<8x1xf32> -> vector<8x1xf32>
    %154 = vector.broadcast %153 : vector<8x1xf32> to vector<8x8xf32>
    %155 = arith.mulf %150, %154 : vector<8x8xf32>
    %cst_53 = arith.constant dense<0.000000e+00> : vector<8x8xf32>
    %156 = tpu.matmul %155, %141, %cst_53 {dimension_numbers = #tpu.dot_dimension_numbers<[1], [0], [0], [1], [0, 0, 1, 1], [], []>} : vector<8x8xf32>, vector<8x8xf32>, vector<8x8xf32> -> vector<8x8xf32>
    %c8_54 = arith.constant 8 : index
    %c24_55 = arith.constant 24 : index
    %157 = vector.load %arg6[%c8_54, %c24_55] : memref<16x32xf32, #tpu.memory_space<vmem>>, vector<8x8xf32>
    tpu.vector_store %arg6[%c8_54, %c24_55], %156 {strides = array<i32>} : memref<16x32xf32, #tpu.memory_space<vmem>>, vector<8x8xf32>,
    %c0_56 = arith.constant 0 : index
    %c0_57 = arith.constant 0 : index
    %158 = vector.load %arg6[%c0_56, %c0_57] : memref<16x32xf32, #tpu.memory_space<vmem>>, vector<16x32xf32>
    %159 = arith.truncf %158 : vector<16x32xf32> to vector<16x32xbf16>
    %c0_58 = arith.constant 0 : index
    %c0_59 = arith.constant 0 : index
    %160 = vector.load %arg3[%c0_58, %c0_59] : memref<32x128xbf16, #tpu.memory_space<vmem>>, vector<32x128xbf16>
    %cst_60 = arith.constant dense<0.000000e+00> : vector<16x128xf32>
    %161 = tpu.matmul %159, %160, %cst_60 {dimension_numbers = #tpu.dot_dimension_numbers<[1], [0], [0], [1], [0, 0, 1, 1], [], []>} : vector<16x32xbf16>, vector<32x128xbf16>, vector<16x128xf32> -> vector<16x128xf32>
    %c0_61 = arith.constant 0 : index
    %c0_62 = arith.constant 0 : index
    %162 = vector.load %arg4[%c0_61, %c0_62] : memref<1x128xf32, #tpu.memory_space<vmem>>, vector<1x128xf32>
    %163 = vector.broadcast %162 : vector<1x128xf32> to vector<16x128xf32>
    %164 = arith.addf %161, %163 : vector<16x128xf32>
    %c0_63 = arith.constant 0 : index
    %c0_64 = arith.constant 0 : index
    %165 = vector.load %arg5[%c0_63, %c0_64] : memref<16x128xf32, #tpu.memory_space<vmem>>, vector<16x128xf32>
    tpu.vector_store %arg5[%c0_63, %c0_64], %164 {strides = array<i32>} : memref<16x128xf32, #tpu.memory_space<vmem>>, vector<16x128xf32>,
    return
  }
  func.func @transform_0(%arg0: i32) -> (i32, i32) {
    %c0_i32 = arith.constant 0 : i32
    %c0_i32_0 = arith.constant 0 : i32
    return %arg0, %c0_i32 : i32, i32
  }
  func.func @transform_1(%arg0: i32) -> (i32, i32) {
    %c0_i32 = arith.constant 0 : i32
    %c0_i32_0 = arith.constant 0 : i32
    %c0_i32_1 = arith.constant 0 : i32
    return %c0_i32, %c0_i32_0 : i32, i32
  }
  func.func @transform_2(%arg0: i32) -> (i32, i32) {
    %c0_i32 = arith.constant 0 : i32
    %c0_i32_0 = arith.constant 0 : i32
    %c0_i32_1 = arith.constant 0 : i32
    return %c0_i32, %c0_i32_0 : i32, i32
  }
  func.func @transform_3(%arg0: i32) -> (i32, i32) {
    %c0_i32 = arith.constant 0 : i32
    %c0_i32_0 = arith.constant 0 : i32
    %c0_i32_1 = arith.constant 0 : i32
    return %c0_i32, %c0_i32_0 : i32, i32
  }
  func.func @transform_4(%arg0: i32) -> (i32, i32) {
    %c0_i32 = arith.constant 0 : i32
    %c0_i32_0 = arith.constant 0 : i32
    return %arg0, %c0_i32 : i32, i32
  }
}

</mosaic_0001>

<llo_original>
// kernel: tpu_custom_call.1
$region0: #{tpu_custom_call.1}
  #allocation0 [shape = 'u32[]', space=smem, size = 0x4, offset = 0x4, fixed_abs, tag = 'smem constant byte address 0x4 - core index']
  #allocation1 [shape = 'u32[72,128]{1,0:T(1,128)}', space=vmem, size = 0x9000, scoped, tag = 'internal scratch']
  #allocation2 [shape = 'f32[16,32]{1,0:T(8,128)}', space=vmem, size = 0x2000, scoped, tag = 'scratch operand']
  %s0 = inlined_call_operand.hbm [shape: bf16[16,32], index: 0, kind: input, shape index: {}]
  %s1 = inlined_call_operand.hbm [shape: bf16[32,96], index: 1, kind: input, shape index: {}]
  %s2 = inlined_call_operand.hbm [shape: bf16[32,128], index: 2, kind: input, shape index: {}]
  %s3 = inlined_call_operand.vmem [shape: f32[1,128], index: 3, kind: input, shape index: {}]
  %s4 = inlined_call_operand.hbm [shape: f32[16,128], index: 4, kind: output, shape index: {}]
  %s5 = sld [smem:[#allocation0]]
  $region38: #{tpu_custom_call.1} parent=0
    _
  %s7 = ssub.s32 1, %s5
  %s8 = scalar_select 0, %s7, %s5
  $region1: #{tpu_custom_call.1} parent=0
    #allocation3 [shape = 'u8[4096]{0}', space=vmem, size = 0x1000, scoped, tag = 'input window, operand 0, single buffered']
    #allocation4 [shape = 's32[1]{0}', space=sflag, size = 0x4, scoped, tag = 'scoped memory for tpu_custom_call.1']
    #allocation5 [shape = 's32[1]{0}', space=sflag, size = 0x4, scoped, tag = 'scoped memory for tpu_custom_call.1']
    #allocation6 [shape = 'u8[8192]{0}', space=vmem, size = 0x2000, scoped, tag = 'input window, operand 1, single buffered']
    #allocation7 [shape = 's32[1]{0}', space=sflag, size = 0x4, scoped, tag = 'scoped memory for tpu_custom_call.1']
    #allocation8 [shape = 'u8[8192]{0}', space=vmem, size = 0x2000, scoped, tag = 'input window, operand 2, single buffered']
    #allocation9 [shape = 'u8[8192]{0}', space=vmem, size = 0x2000, scoped, tag = 'output window, operand 0, single buffered']
    %9 = vsyncpa [#allocation4], 0
    %10 = vsyncpa [#allocation7], 0
    %11 = vsyncpa [#allocation5], 0
    // Predicated region
    $region2: #{tpu_custom_call.1} parent=1 // pred_check
      _
    $region3: #{tpu_custom_call.1} parent=1 // pred_check_branch
      %13 = sbr.rel (0) target = $region5
    $region4: #{tpu_custom_call.1} parent=1 // pred_region
      %15 = vsyncadd [#allocation4], 0
      %s16 = sshll.u32 %s0, 4
      %s17 = int_to_ptr.hbm [resolvable:$true] %s16
      %s18 = sshll.u32 [#allocation3], 4
      %s19 = int_to_ptr.vmem [resolvable:$true] %s18
      %24 = dma.hbm_to_vmem [thread:$0]  %s17, 128, %s19, [#allocation4], 64, 64, 4
    $region5: #{tpu_custom_call.1} parent=1 // pred_fallthru
      _
    // Predicated region
    $region6: #{tpu_custom_call.1} parent=1 // pred_check
      _
    $region7: #{tpu_custom_call.1} parent=1 // pred_check_branch
      %26 = sbr.rel (0) target = $region9
    $region8: #{tpu_custom_call.1} parent=1 // pred_region
      %28 = vsyncadd [#allocation7], 0
      %s29 = sshll.u32 %s1, 4
      %s30 = int_to_ptr.hbm [resolvable:$true] %s29
      %s31 = sshll.u32 [#allocation6], 4
      %s32 = int_to_ptr.vmem [resolvable:$true] %s31
      %37 = dma.hbm_to_vmem [thread:$0]  %s30, 256, %s32, [#allocation7], 64, 64, 4
    $region9: #{tpu_custom_call.1} parent=1 // pred_fallthru
      _
    // Predicated region
    $region10: #{tpu_custom_call.1} parent=1 // pred_check
      _
    $region11: #{tpu_custom_call.1} parent=1 // pred_check_branch
      %39 = sbr.rel (0) target = $region13
    $region12: #{tpu_custom_call.1} parent=1 // pred_region
      %41 = vsyncadd [#allocation7], 0
      %s42 = sshll.u32 %s2, 4
      %s43 = int_to_ptr.hbm [resolvable:$true] %s42
      %s44 = sshll.u32 [#allocation8], 4
      %s45 = int_to_ptr.vmem [resolvable:$true] %s44
      %50 = dma.hbm_to_vmem [thread:$0]  %s43, 256, %s45, [#allocation7], 64, 64, 4
    $region13: #{tpu_custom_call.1} parent=1 // pred_fallthru
      _
    // Predicated region
    $region14: #{tpu_custom_call.1} parent=1 // pred_check
      _
    $region15: #{tpu_custom_call.1} parent=1 // pred_check_branch
      %52 = sbr.rel (0) target = $region17
    $region16: #{tpu_custom_call.1} parent=1 // pred_region
      _
    $region17: #{tpu_custom_call.1} parent=1 // pred_fallthru
      _
    // Predicated region
    $region18: #{tpu_custom_call.1} parent=1 // pred_check
      _
    $region19: #{tpu_custom_call.1} parent=1 // pred_check_branch
      %54 = sbr.rel (0) target = $region21
    $region20: #{tpu_custom_call.1} parent=1 // pred_region
      %56 = dma.done [#allocation4], 128
    $region21: #{tpu_custom_call.1} parent=1 // pred_fallthru
      _
    // Predicated region
    $region22: #{tpu_custom_call.1} parent=1 // pred_check
      _
    $region23: #{tpu_custom_call.1} parent=1 // pred_check_branch
      %58 = sbr.rel (0) target = $region25
    $region24: #{tpu_custom_call.1} parent=1 // pred_region
      %60 = dma.done [#allocation7], 256
    $region25: #{tpu_custom_call.1} parent=1 // pred_fallthru
      _
    // Predicated region
    $region26: #{tpu_custom_call.1} parent=1 // pred_check
      _
    $region27: #{tpu_custom_call.1} parent=1 // pred_check_branch
      %62 = sbr.rel (0) target = $region29
    $region28: #{tpu_custom_call.1} parent=1 // pred_region
      %64 = dma.done [#allocation7], 256
    $region29: #{tpu_custom_call.1} parent=1 // pred_fallthru
      _
    %v66 = vld [vmem:[#allocation3] sm:$0xf]
    %v67 = vld [vmem:[#allocation3 + $0x4] sm:$0xf]
    %v68 = vld [vmem:[#allocation6] sm:$0xf]
    %v69 = vld [vmem:[#allocation6 + $0x4] sm:$0xf]
    %v70 = vld [vmem:[#allocation6 + $0x8] sm:$0xf]
    %v71 = vld [vmem:[#allocation6 + $0xc] sm:$0xf]
    %v74 = vunpack.c.l.b16 %v66
    %v75 = vunpack.c.l.b16 %v67
    %v76 = vpack.c.b16 %v75, %v74
    %v81 = vunpack.c.l.b16 %v68
    %v82 = vunpack.c.l.b16 %v69
    %v83 = vunpack.c.l.b16 %v70
    %v84 = vunpack.c.l.b16 %v71
    %v85 = vpack.c.b16 %v82, %v81
    %v86 = vpack.c.b16 %v84, %v83
    %vm89 = vcmask 261120
    %v91 = vsel %vm89, %v76, 0
    %93 = vmatpush.bf16.msra.mxu0 0
    %94 = vmatpush.bf16.msra.mxu0 0
    %95 = vmatpush.bf16.msra.mxu0 0
    %96 = vmatpush.bf16.msra.mxu0 0
    %97 = vmatpush.bf16.msra.mxu0 0
    %98 = vmatpush.bf16.msra.mxu0 0
    %99 = vmatpush.bf16.msra.mxu0 %v86
    %100 = vmatpush.bf16.msra.mxu0 %v85
    %101 = vmatmul.bf16.gmra.mxu0 %v91
    %v102 = vpop.f32.mrf.mxu0
    %v103 = vadd.f32 0.0, %v102
    %v104 = vpop.f32.mrf.mxu0
    %v105 = vadd.f32 0.0, %v104
    %106 = vdwg.mxu0
    %v107 = vlaneseq
    %v108 = vshrl.u32 %v107, 7
    %v109 = vlaneseq
    %v110 = vand.u32 %v109, 127
    %vm111 = vcmp.le.s32.totalorder %v110, %v108
    %113 = vrot.lane.b32.xlu0 %v103, 96
    %v114 = vpop.permute.xlu0 %113
    %vm115 = vcmask 64512
    %v116 = vsel %vm115, %v103, 0
    %v118 = vsel %vm115, %v114, 0
    %120 = vmatpush.xpose.msra.mxu0 0.0
    %121 = vmatpush.xpose.msra.mxu0 0.0
    %122 = vmatpush.xpose.msra.mxu0 0.0
    %123 = vmatpush.xpose.msra.mxu0 0.0
    %124 = vmatpush.xpose.msra.mxu0 0.0
    %125 = vmatpush.xpose.msra.mxu0 0.0
    %126 = vmatpush.xpose.msra.mxu0 0.0
    %127 = vmatpush.xpose.msra.mxu0 0.0
    %128 = vmatpush.xpose.msra.mxu0 0.0
    %129 = vmatpush.xpose.msra.mxu0 0.0
    %130 = vmatpush.xpose.msra.mxu0 0.0
    %131 = vmatpush.xpose.msra.mxu0 0.0
    %132 = vmatpush.xpose.msra.mxu0 0.0
    %133 = vmatpush.xpose.msra.mxu0 0.0
    %134 = vmatpush.xpose.msra.mxu0 0.0
    %135 = vmatpush.xpose.msra.mxu0 %v118
    %136 = vmatmul.f32.gmra.mxu0 %v116
    %v137 = vpop.f32.mrf.mxu0
    %v138 = vadd.f32 0.0, %v137
    %139 = vdwg.mxu0
    %v140 = vsel %vm111, %v138, -1e+30
    %v141 = vsel %vm115, %v140, -inf
    %142 = vmax.xlane.f32.xlu0 %v141
    %v143 = vpop.xlane.xlu0 %142
    %v144 = vsub.f32 %v140, %v143
    %v145 = vmul.f32 %v144, 1.442695
    %v146 = vpow.pop %v145
    %v147 = vsel %vm115, %v146, 0.0
    %148 = vadd.xlane.f32.xlu0 %v147
    %v149 = vpop.xlane.xlu0 %148
    %v150 = vrcp.pop %v149
    %v151 = vmul.f32 %v146, %v150
    %152 = vrot.lane.b32.xlu0 %v103, 64
    %v153 = vpop.permute.xlu0 %152
    %v156 = vsel %vm115, %v151, 0
    %158 = vmatpush.msra.mxu0 0.0
    %159 = vmatpush.msra.mxu0 0.0
    %160 = vmatpush.msra.mxu0 0.0
    %161 = vmatpush.msra.mxu0 0.0
    %162 = vmatpush.msra.mxu0 0.0
    %163 = vmatpush.msra.mxu0 0.0
    %164 = vmatpush.msra.mxu0 0.0
    %165 = vmatpush.msra.mxu0 0.0
    %166 = vmatpush.msra.mxu0 0.0
    %167 = vmatpush.msra.mxu0 0.0
    %168 = vmatpush.msra.mxu0 0.0
    %169 = vmatpush.msra.mxu0 0.0
    %170 = vmatpush.msra.mxu0 0.0
    %171 = vmatpush.msra.mxu0 0.0
    %172 = vmatpush.msra.mxu0 0.0
    %173 = vmatpush.msra.mxu0 %v153
    %174 = vmatmul.f32.gmra.mxu0 %v156
    %v175 = vpop.f32.mrf.mxu0
    %v176 = vadd.f32 0.0, %v175
    %177 = vdwg.mxu0
    %178 = vst.msk [vmem:[#allocation2] sm:$0xff] %vm115, %v176
    %179 = vrot.lane.b32.xlu0 %v103, 120
    %v180 = vpop.permute.xlu0 %179
    %181 = vrot.lane.b32.xlu0 %v103, 88
    %v182 = vpop.permute.xlu0 %181
    %v183 = vsel %vm115, %v180, 0
    %v185 = vsel %vm115, %v182, 0
    %187 = vmatpush.xpose.msra.mxu0 0.0
    %188 = vmatpush.xpose.msra.mxu0 0.0
    %189 = vmatpush.xpose.msra.mxu0 0.0
    %190 = vmatpush.xpose.msra.mxu0 0.0
    %191 = vmatpush.xpose.msra.mxu0 0.0
    %192 = vmatpush.xpose.msra.mxu0 0.0
    %193 = vmatpush.xpose.msra.mxu0 0.0
    %194 = vmatpush.xpose.msra.mxu0 0.0
    %195 = vmatpush.xpose.msra.mxu0 0.0
    %196 = vmatpush.xpose.msra.mxu0 0.0
    %197 = vmatpush.xpose.msra.mxu0 0.0
    %198 = vmatpush.xpose.msra.mxu0 0.0
    %199 = vmatpush.xpose.msra.mxu0 0.0
    %200 = vmatpush.xpose.msra.mxu0 0.0
    %201 = vmatpush.xpose.msra.mxu0 0.0
    %202 = vmatpush.xpose.msra.mxu0 %v185
    %203 = vmatmul.f32.gmra.mxu0 %v183
    %v204 = vpop.f32.mrf.mxu0
    %v205 = vadd.f32 0.0, %v204
    %206 = vdwg.mxu0
    %v207 = vsel %vm111, %v205, -1e+30
    %v208 = vsel %vm115, %v207, -inf
    %209 = vmax.xlane.f32.xlu0 %v208
    %v210 = vpop.xlane.xlu0 %209
    %v211 = vsub.f32 %v207, %v210
    %v212 = vmul.f32 %v211, 1.442695
    %v213 = vpow.pop %v212
    %v214 = vsel %vm115, %v213, 0.0
    %215 = vadd.xlane.f32.xlu0 %v214
    %v216 = vpop.xlane.xlu0 %215
    %v217 = vrcp.pop %v216
    %v218 = vmul.f32 %v213, %v217
    %219 = vrot.lane.b32.xlu0 %v103, 56
    %v220 = vpop.permute.xlu0 %219
    %v223 = vsel %vm115, %v218, 0
    %225 = vmatpush.msra.mxu0 0.0
    %226 = vmatpush.msra.mxu0 0.0
    %227 = vmatpush.msra.mxu0 0.0
    %228 = vmatpush.msra.mxu0 0.0
    %229 = vmatpush.msra.mxu0 0.0
    %230 = vmatpush.msra.mxu0 0.0
    %231 = vmatpush.msra.mxu0 0.0
    %232 = vmatpush.msra.mxu0 0.0
    %233 = vmatpush.msra.mxu0 0.0
    %234 = vmatpush.msra.mxu0 0.0
    %235 = vmatpush.msra.mxu0 0.0
    %236 = vmatpush.msra.mxu0 0.0
    %237 = vmatpush.msra.mxu0 0.0
    %238 = vmatpush.msra.mxu0 0.0
    %239 = vmatpush.msra.mxu0 0.0
    %240 = vmatpush.msra.mxu0 %v220
    %241 = vmatmul.f32.gmra.mxu0 %v223
    %v242 = vpop.f32.mrf.mxu0
    %v243 = vadd.f32 0.0, %v242
    %244 = vdwg.mxu0
    %246 = vrot.lane.b32.xlu0 %v243, 8
    %v247 = vpop.permute.xlu0 %246
    %vm249 = vcmask 130112
    %250 = vst.msk [vmem:[#allocation2] sm:$0xff] %vm249, %v247
    %251 = vrot.lane.b32.xlu0 %v103, 112
    %v252 = vpop.permute.xlu0 %251
    %253 = vrot.lane.b32.xlu0 %v103, 80
    %v254 = vpop.permute.xlu0 %253
    %v255 = vsel %vm115, %v252, 0
    %v257 = vsel %vm115, %v254, 0
    %259 = vmatpush.xpose.msra.mxu0 0.0
    %260 = vmatpush.xpose.msra.mxu0 0.0
    %261 = vmatpush.xpose.msra.mxu0 0.0
    %262 = vmatpush.xpose.msra.mxu0 0.0
    %263 = vmatpush.xpose.msra.mxu0 0.0
    %264 = vmatpush.xpose.msra.mxu0 0.0
    %265 = vmatpush.xpose.msra.mxu0 0.0
    %266 = vmatpush.xpose.msra.mxu0 0.0
    %267 = vmatpush.xpose.msra.mxu0 0.0
    %268 = vmatpush.xpose.msra.mxu0 0.0
    %269 = vmatpush.xpose.msra.mxu0 0.0
    %270 = vmatpush.xpose.msra.mxu0 0.0
    %271 = vmatpush.xpose.msra.mxu0 0.0
    %272 = vmatpush.xpose.msra.mxu0 0.0
    %273 = vmatpush.xpose.msra.mxu0 0.0
    %274 = vmatpush.xpose.msra.mxu0 %v257
    %275 = vmatmul.f32.gmra.mxu0 %v255
    %v276 = vpop.f32.mrf.mxu0
    %v277 = vadd.f32 0.0, %v276
    %278 = vdwg.mxu0
    %v279 = vsel %vm111, %v277, -1e+30
    %v280 = vsel %vm115, %v279, -inf
    %281 = vmax.xlane.f32.xlu0 %v280
    %v282 = vpop.xlane.xlu0 %281
    %v283 = vsub.f32 %v279, %v282
    %v284 = vmul.f32 %v283, 1.442695
    %v285 = vpow.pop %v284
    %v286 = vsel %vm115, %v285, 0.0
    %287 = vadd.xlane.f32.xlu0 %v286
    %v288 = vpop.xlane.xlu0 %287
    %v289 = vrcp.pop %v288
    %v290 = vmul.f32 %v285, %v289
    %291 = vrot.lane.b32.xlu0 %v103, 48
    %v292 = vpop.permute.xlu0 %291
    %v295 = vsel %vm115, %v290, 0
    %297 = vmatpush.msra.mxu0 0.0
    %298 = vmatpush.msra.mxu0 0.0
    %299 = vmatpush.msra.mxu0 0.0
    %300 = vmatpush.msra.mxu0 0.0
    %301 = vmatpush.msra.mxu0 0.0
    %302 = vmatpush.msra.mxu0 0.0
    %303 = vmatpush.msra.mxu0 0.0
    %304 = vmatpush.msra.mxu0 0.0
    %305 = vmatpush.msra.mxu0 0.0
    %306 = vmatpush.msra.mxu0 0.0
    %307 = vmatpush.msra.mxu0 0.0
    %308 = vmatpush.msra.mxu0 0.0
    %309 = vmatpush.msra.mxu0 0.0
    %310 = vmatpush.msra.mxu0 0.0
    %311 = vmatpush.msra.mxu0 0.0
    %312 = vmatpush.msra.mxu0 %v292
    %313 = vmatmul.f32.gmra.mxu0 %v295
    %v314 = vpop.f32.mrf.mxu0
    %v315 = vadd.f32 0.0, %v314
    %316 = vdwg.mxu0
    %318 = vrot.lane.b32.xlu0 %v315, 16
    %v319 = vpop.permute.xlu0 %318
    %vm321 = vcmask 195712
    %322 = vst.msk [vmem:[#allocation2] sm:$0xff] %vm321, %v319
    %323 = vrot.lane.b32.xlu0 %v103, 104
    %v324 = vpop.permute.xlu0 %323
    %325 = vrot.lane.b32.xlu0 %v103, 72
    %v326 = vpop.permute.xlu0 %325
    %v327 = vsel %vm115, %v324, 0
    %v329 = vsel %vm115, %v326, 0
    %331 = vmatpush.xpose.msra.mxu0 0.0
    %332 = vmatpush.xpose.msra.mxu0 0.0
    %333 = vmatpush.xpose.msra.mxu0 0.0
    %334 = vmatpush.xpose.msra.mxu0 0.0
    %335 = vmatpush.xpose.msra.mxu0 0.0
    %336 = vmatpush.xpose.msra.mxu0 0.0
    %337 = vmatpush.xpose.msra.mxu0 0.0
    %338 = vmatpush.xpose.msra.mxu0 0.0
    %339 = vmatpush.xpose.msra.mxu0 0.0
    %340 = vmatpush.xpose.msra.mxu0 0.0
    %341 = vmatpush.xpose.msra.mxu0 0.0
    %342 = vmatpush.xpose.msra.mxu0 0.0
    %343 = vmatpush.xpose.msra.mxu0 0.0
    %344 = vmatpush.xpose.msra.mxu0 0.0
    %345 = vmatpush.xpose.msra.mxu0 0.0
    %346 = vmatpush.xpose.msra.mxu0 %v329
    %347 = vmatmul.f32.gmra.mxu0 %v327
    %v348 = vpop.f32.mrf.mxu0
    %v349 = vadd.f32 0.0, %v348
    %350 = vdwg.mxu0
    %v351 = vsel %vm111, %v349, -1e+30
    %v352 = vsel %vm115, %v351, -inf
    %353 = vmax.xlane.f32.xlu0 %v352
    %v354 = vpop.xlane.xlu0 %353
    %v355 = vsub.f32 %v351, %v354
    %v356 = vmul.f32 %v355, 1.442695
    %v357 = vpow.pop %v356
    %v358 = vsel %vm115, %v357, 0.0
    %359 = vadd.xlane.f32.xlu0 %v358
    %v360 = vpop.xlane.xlu0 %359
    %v361 = vrcp.pop %v360
    %v362 = vmul.f32 %v357, %v361
    %363 = vrot.lane.b32.xlu0 %v103, 40
    %v364 = vpop.permute.xlu0 %363
    %v367 = vsel %vm115, %v362, 0
    %369 = vmatpush.msra.mxu0 0.0
    %370 = vmatpush.msra.mxu0 0.0
    %371 = vmatpush.msra.mxu0 0.0
    %372 = vmatpush.msra.mxu0 0.0
    %373 = vmatpush.msra.mxu0 0.0
    %374 = vmatpush.msra.mxu0 0.0
    %375 = vmatpush.msra.mxu0 0.0
    %376 = vmatpush.msra.mxu0 0.0
    %377 = vmatpush.msra.mxu0 0.0
    %378 = vmatpush.msra.mxu0 0.0
    %379 = vmatpush.msra.mxu0 0.0
    %380 = vmatpush.msra.mxu0 0.0
    %381 = vmatpush.msra.mxu0 0.0
    %382 = vmatpush.msra.mxu0 0.0
    %383 = vmatpush.msra.mxu0 0.0
    %384 = vmatpush.msra.mxu0 %v364
    %385 = vmatmul.f32.gmra.mxu0 %v367
    %v386 = vpop.f32.mrf.mxu0
    %v387 = vadd.f32 0.0, %v386
    %388 = vdwg.mxu0
    %390 = vrot.lane.b32.xlu0 %v387, 24
    %v391 = vpop.permute.xlu0 %390
    %vm393 = vcmask 261312
    %394 = vst.msk [vmem:[#allocation2] sm:$0xff] %vm393, %v391
    %396 = vrot.lane.b32.xlu0 %v105, 96
    %v397 = vpop.permute.xlu0 %396
    %v398 = vsel %vm115, %v105, 0
    %v400 = vsel %vm115, %v397, 0
    %402 = vmatpush.xpose.msra.mxu0 0.0
    %403 = vmatpush.xpose.msra.mxu0 0.0
    %404 = vmatpush.xpose.msra.mxu0 0.0
    %405 = vmatpush.xpose.msra.mxu0 0.0
    %406 = vmatpush.xpose.msra.mxu0 0.0
    %407 = vmatpush.xpose.msra.mxu0 0.0
    %408 = vmatpush.xpose.msra.mxu0 0.0
    %409 = vmatpush.xpose.msra.mxu0 0.0
    %410 = vmatpush.xpose.msra.mxu0 0.0
    %411 = vmatpush.xpose.msra.mxu0 0.0
    %412 = vmatpush.xpose.msra.mxu0 0.0
    %413 = vmatpush.xpose.msra.mxu0 0.0
    %414 = vmatpush.xpose.msra.mxu0 0.0
    %415 = vmatpush.xpose.msra.mxu0 0.0
    %416 = vmatpush.xpose.msra.mxu0 0.0
    %417 = vmatpush.xpose.msra.mxu0 %v400
    %418 = vmatmul.f32.gmra.mxu0 %v398
    %v419 = vpop.f32.mrf.mxu0
    %v420 = vadd.f32 0.0, %v419
    %421 = vdwg.mxu0
    %v422 = vsel %vm111, %v420, -1e+30
    %v423 = vsel %vm115, %v422, -inf
    %424 = vmax.xlane.f32.xlu0 %v423
    %v425 = vpop.xlane.xlu0 %424
    %v426 = vsub.f32 %v422, %v425
    %v427 = vmul.f32 %v426, 1.442695
    %v428 = vpow.pop %v427
    %v429 = vsel %vm115, %v428, 0.0
    %430 = vadd.xlane.f32.xlu0 %v429
    %v431 = vpop.xlane.xlu0 %430
    %v432 = vrcp.pop %v431
    %v433 = vmul.f32 %v428, %v432
    %434 = vrot.lane.b32.xlu0 %v105, 64
    %v435 = vpop.permute.xlu0 %434
    %v438 = vsel %vm115, %v433, 0
    %440 = vmatpush.msra.mxu0 0.0
    %441 = vmatpush.msra.mxu0 0.0
    %442 = vmatpush.msra.mxu0 0.0
    %443 = vmatpush.msra.mxu0 0.0
    %444 = vmatpush.msra.mxu0 0.0
    %445 = vmatpush.msra.mxu0 0.0
    %446 = vmatpush.msra.mxu0 0.0
    %447 = vmatpush.msra.mxu0 0.0
    %448 = vmatpush.msra.mxu0 0.0
    %449 = vmatpush.msra.mxu0 0.0
    %450 = vmatpush.msra.mxu0 0.0
    %451 = vmatpush.msra.mxu0 0.0
    %452 = vmatpush.msra.mxu0 0.0
    %453 = vmatpush.msra.mxu0 0.0
    %454 = vmatpush.msra.mxu0 0.0
    %455 = vmatpush.msra.mxu0 %v435
    %456 = vmatmul.f32.gmra.mxu0 %v438
    %v457 = vpop.f32.mrf.mxu0
    %v458 = vadd.f32 0.0, %v457
    %459 = vdwg.mxu0
    %460 = vst.msk [vmem:[#allocation2 + $0x8] sm:$0xff] %vm115, %v458
    %461 = vrot.lane.b32.xlu0 %v105, 120
    %v462 = vpop.permute.xlu0 %461
    %463 = vrot.lane.b32.xlu0 %v105, 88
    %v464 = vpop.permute.xlu0 %463
    %v465 = vsel %vm115, %v462, 0
    %v467 = vsel %vm115, %v464, 0
    %469 = vmatpush.xpose.msra.mxu0 0.0
    %470 = vmatpush.xpose.msra.mxu0 0.0
    %471 = vmatpush.xpose.msra.mxu0 0.0
    %472 = vmatpush.xpose.msra.mxu0 0.0
    %473 = vmatpush.xpose.msra.mxu0 0.0
    %474 = vmatpush.xpose.msra.mxu0 0.0
    %475 = vmatpush.xpose.msra.mxu0 0.0
    %476 = vmatpush.xpose.msra.mxu0 0.0
    %477 = vmatpush.xpose.msra.mxu0 0.0
    %478 = vmatpush.xpose.msra.mxu0 0.0
    %479 = vmatpush.xpose.msra.mxu0 0.0
    %480 = vmatpush.xpose.msra.mxu0 0.0
    %481 = vmatpush.xpose.msra.mxu0 0.0
    %482 = vmatpush.xpose.msra.mxu0 0.0
    %483 = vmatpush.xpose.msra.mxu0 0.0
    %484 = vmatpush.xpose.msra.mxu0 %v467
    %485 = vmatmul.f32.gmra.mxu0 %v465
    %v486 = vpop.f32.mrf.mxu0
    %v487 = vadd.f32 0.0, %v486
    %488 = vdwg.mxu0
    %v489 = vsel %vm111, %v487, -1e+30
    %v490 = vsel %vm115, %v489, -inf
    %491 = vmax.xlane.f32.xlu0 %v490
    %v492 = vpop.xlane.xlu0 %491
    %v493 = vsub.f32 %v489, %v492
    %v494 = vmul.f32 %v493, 1.442695
    %v495 = vpow.pop %v494
    %v496 = vsel %vm115, %v495, 0.0
    %497 = vadd.xlane.f32.xlu0 %v496
    %v498 = vpop.xlane.xlu0 %497
    %v499 = vrcp.pop %v498
    %v500 = vmul.f32 %v495, %v499
    %501 = vrot.lane.b32.xlu0 %v105, 56
    %v502 = vpop.permute.xlu0 %501
    %v505 = vsel %vm115, %v500, 0
    %507 = vmatpush.msra.mxu0 0.0
    %508 = vmatpush.msra.mxu0 0.0
    %509 = vmatpush.msra.mxu0 0.0
    %510 = vmatpush.msra.mxu0 0.0
    %511 = vmatpush.msra.mxu0 0.0
    %512 = vmatpush.msra.mxu0 0.0
    %513 = vmatpush.msra.mxu0 0.0
    %514 = vmatpush.msra.mxu0 0.0
    %515 = vmatpush.msra.mxu0 0.0
    %516 = vmatpush.msra.mxu0 0.0
    %517 = vmatpush.msra.mxu0 0.0
    %518 = vmatpush.msra.mxu0 0.0
    %519 = vmatpush.msra.mxu0 0.0
    %520 = vmatpush.msra.mxu0 0.0
    %521 = vmatpush.msra.mxu0 0.0
    %522 = vmatpush.msra.mxu0 %v502
    %523 = vmatmul.f32.gmra.mxu0 %v505
    %v524 = vpop.f32.mrf.mxu0
    %v525 = vadd.f32 0.0, %v524
    %526 = vdwg.mxu0
    %528 = vrot.lane.b32.xlu0 %v525, 8
    %v529 = vpop.permute.xlu0 %528
    %531 = vst.msk [vmem:[#allocation2 + $0x8] sm:$0xff] %vm249, %v529
    %532 = vrot.lane.b32.xlu0 %v105, 112
    %v533 = vpop.permute.xlu0 %532
    %534 = vrot.lane.b32.xlu0 %v105, 80
    %v535 = vpop.permute.xlu0 %534
    %v536 = vsel %vm115, %v533, 0
    %v538 = vsel %vm115, %v535, 0
    %540 = vmatpush.xpose.msra.mxu0 0.0
    %541 = vmatpush.xpose.msra.mxu0 0.0
    %542 = vmatpush.xpose.msra.mxu0 0.0
    %543 = vmatpush.xpose.msra.mxu0 0.0
    %544 = vmatpush.xpose.msra.mxu0 0.0
    %545 = vmatpush.xpose.msra.mxu0 0.0
    %546 = vmatpush.xpose.msra.mxu0 0.0
    %547 = vmatpush.xpose.msra.mxu0 0.0
    %548 = vmatpush.xpose.msra.mxu0 0.0
    %549 = vmatpush.xpose.msra.mxu0 0.0
    %550 = vmatpush.xpose.msra.mxu0 0.0
    %551 = vmatpush.xpose.msra.mxu0 0.0
    %552 = vmatpush.xpose.msra.mxu0 0.0
    %553 = vmatpush.xpose.msra.mxu0 0.0
    %554 = vmatpush.xpose.msra.mxu0 0.0
    %555 = vmatpush.xpose.msra.mxu0 %v538
    %556 = vmatmul.f32.gmra.mxu0 %v536
    %v557 = vpop.f32.mrf.mxu0
    %v558 = vadd.f32 0.0, %v557
    %559 = vdwg.mxu0
    %v560 = vsel %vm111, %v558, -1e+30
    %v561 = vsel %vm115, %v560, -inf
    %562 = vmax.xlane.f32.xlu0 %v561
    %v563 = vpop.xlane.xlu0 %562
    %v564 = vsub.f32 %v560, %v563
    %v565 = vmul.f32 %v564, 1.442695
    %v566 = vpow.pop %v565
    %v567 = vsel %vm115, %v566, 0.0
    %568 = vadd.xlane.f32.xlu0 %v567
    %v569 = vpop.xlane.xlu0 %568
    %v570 = vrcp.pop %v569
    %v571 = vmul.f32 %v566, %v570
    %572 = vrot.lane.b32.xlu0 %v105, 48
    %v573 = vpop.permute.xlu0 %572
    %v576 = vsel %vm115, %v571, 0
    %578 = vmatpush.msra.mxu0 0.0
    %579 = vmatpush.msra.mxu0 0.0
    %580 = vmatpush.msra.mxu0 0.0
    %581 = vmatpush.msra.mxu0 0.0
    %582 = vmatpush.msra.mxu0 0.0
    %583 = vmatpush.msra.mxu0 0.0
    %584 = vmatpush.msra.mxu0 0.0
    %585 = vmatpush.msra.mxu0 0.0
    %586 = vmatpush.msra.mxu0 0.0
    %587 = vmatpush.msra.mxu0 0.0
    %588 = vmatpush.msra.mxu0 0.0
    %589 = vmatpush.msra.mxu0 0.0
    %590 = vmatpush.msra.mxu0 0.0
    %591 = vmatpush.msra.mxu0 0.0
    %592 = vmatpush.msra.mxu0 0.0
    %593 = vmatpush.msra.mxu0 %v573
    %594 = vmatmul.f32.gmra.mxu0 %v576
    %v595 = vpop.f32.mrf.mxu0
    %v596 = vadd.f32 0.0, %v595
    %597 = vdwg.mxu0
    %599 = vrot.lane.b32.xlu0 %v596, 16
    %v600 = vpop.permute.xlu0 %599
    %602 = vst.msk [vmem:[#allocation2 + $0x8] sm:$0xff] %vm321, %v600
    %603 = vrot.lane.b32.xlu0 %v105, 104
    %v604 = vpop.permute.xlu0 %603
    %605 = vrot.lane.b32.xlu0 %v105, 72
    %v606 = vpop.permute.xlu0 %605
    %v607 = vsel %vm115, %v604, 0
    %v609 = vsel %vm115, %v606, 0
    %611 = vmatpush.xpose.msra.mxu0 0.0
    %612 = vmatpush.xpose.msra.mxu0 0.0
    %613 = vmatpush.xpose.msra.mxu0 0.0
    %614 = vmatpush.xpose.msra.mxu0 0.0
    %615 = vmatpush.xpose.msra.mxu0 0.0
    %616 = vmatpush.xpose.msra.mxu0 0.0
    %617 = vmatpush.xpose.msra.mxu0 0.0
    %618 = vmatpush.xpose.msra.mxu0 0.0
    %619 = vmatpush.xpose.msra.mxu0 0.0
    %620 = vmatpush.xpose.msra.mxu0 0.0
    %621 = vmatpush.xpose.msra.mxu0 0.0
    %622 = vmatpush.xpose.msra.mxu0 0.0
    %623 = vmatpush.xpose.msra.mxu0 0.0
    %624 = vmatpush.xpose.msra.mxu0 0.0
    %625 = vmatpush.xpose.msra.mxu0 0.0
    %626 = vmatpush.xpose.msra.mxu0 %v609
    %627 = vmatmul.f32.gmra.mxu0 %v607
    %v628 = vpop.f32.mrf.mxu0
    %v629 = vadd.f32 0.0, %v628
    %630 = vdwg.mxu0
    %v631 = vsel %vm111, %v629, -1e+30
    %v632 = vsel %vm115, %v631, -inf
    %633 = vmax.xlane.f32.xlu0 %v632
    %v634 = vpop.xlane.xlu0 %633
    %v635 = vsub.f32 %v631, %v634
    %v636 = vmul.f32 %v635, 1.442695
    %v637 = vpow.pop %v636
    %v638 = vsel %vm115, %v637, 0.0
    %639 = vadd.xlane.f32.xlu0 %v638
    %v640 = vpop.xlane.xlu0 %639
    %v641 = vrcp.pop %v640
    %v642 = vmul.f32 %v637, %v641
    %643 = vrot.lane.b32.xlu0 %v105, 40
    %v644 = vpop.permute.xlu0 %643
    %v647 = vsel %vm115, %v642, 0
    %649 = vmatpush.msra.mxu0 0.0
    %650 = vmatpush.msra.mxu0 0.0
    %651 = vmatpush.msra.mxu0 0.0
    %652 = vmatpush.msra.mxu0 0.0
    %653 = vmatpush.msra.mxu0 0.0
    %654 = vmatpush.msra.mxu0 0.0
    %655 = vmatpush.msra.mxu0 0.0
    %656 = vmatpush.msra.mxu0 0.0
    %657 = vmatpush.msra.mxu0 0.0
    %658 = vmatpush.msra.mxu0 0.0
    %659 = vmatpush.msra.mxu0 0.0
    %660 = vmatpush.msra.mxu0 0.0
    %661 = vmatpush.msra.mxu0 0.0
    %662 = vmatpush.msra.mxu0 0.0
    %663 = vmatpush.msra.mxu0 0.0
    %664 = vmatpush.msra.mxu0 %v644
    %665 = vmatmul.f32.gmra.mxu0 %v647
    %v666 = vpop.f32.mrf.mxu0
    %v667 = vadd.f32 0.0, %v666
    %668 = vdwg.mxu0
    %670 = vrot.lane.b32.xlu0 %v667, 24
    %v671 = vpop.permute.xlu0 %670
    %673 = vst.msk [vmem:[#allocation2 + $0x8] sm:$0xff] %vm393, %v671
    %v674 = vld [vmem:[#allocation2] sm:$0xff]
    %v675 = vld [vmem:[#allocation2 + $0x8] sm:$0xff]
    %v676 = vpack.c.bf16 %v675, %v674
    %v677 = vld [vmem:[#allocation8] sm:$0xf]
    %v678 = vld [vmem:[#allocation8 + $0x4] sm:$0xf]
    %v679 = vld [vmem:[#allocation8 + $0x8] sm:$0xf]
    %v680 = vld [vmem:[#allocation8 + $0xc] sm:$0xf]
    %v681 = vld [vmem:[%s3] sm:$0x1]
    %v683 = vperm.slane %v681, 0
    %v689 = vunpack.c.l.b16 %v677
    %v690 = vunpack.c.l.b16 %v678
    %v691 = vunpack.c.l.b16 %v679
    %v692 = vunpack.c.l.b16 %v680
    %v693 = vpack.c.b16 %v690, %v689
    %v694 = vpack.c.b16 %v692, %v691
    %v698 = vsel %vm89, %v676, 0
    %700 = vmatpush.bf16.msra.mxu0 0
    %701 = vmatpush.bf16.msra.mxu0 0
    %702 = vmatpush.bf16.msra.mxu0 0
    %703 = vmatpush.bf16.msra.mxu0 0
    %704 = vmatpush.bf16.msra.mxu0 0
    %705 = vmatpush.bf16.msra.mxu0 0
    %706 = vmatpush.bf16.msra.mxu0 %v694
    %707 = vmatpush.bf16.msra.mxu0 %v693
    %708 = vmatmul.bf16.gmra.mxu0 %v698
    %v709 = vpop.f32.mrf.mxu0
    %v710 = vadd.f32 %v683, %v709
    %v711 = vpop.f32.mrf.mxu0
    %v712 = vadd.f32 %v683, %v711
    %713 = vdwg.mxu0
    %714 = vst [vmem:[#allocation9] sm:$0xff] %v710
    %715 = vst [vmem:[#allocation9 + $0x8] sm:$0xff] %v712
    // Predicated region
    $region30: #{tpu_custom_call.1} parent=1 // pred_check
      _
    $region31: #{tpu_custom_call.1} parent=1 // pred_check_branch
      %717 = sbr.rel (0) target = $region33
    $region32: #{tpu_custom_call.1} parent=1 // pred_region
      %719 = vsyncadd [#allocation5], 0
      %s720 = sshll.u32 [#allocation9], 4
      %s721 = int_to_ptr.vmem [resolvable:$true] %s720
      %s722 = sshll.u32 %s4, 4
      %s723 = int_to_ptr.hbm [resolvable:$true] %s722
      %728 = dma.vmem_to_hbm [thread:$0]  %s721, 256, %s723, [#allocation5], 128, 128, 8
    $region33: #{tpu_custom_call.1} parent=1 // pred_fallthru
      _
    // Predicated region
    $region34: #{tpu_custom_call.1} parent=1 // pred_check
      _
    $region35: #{tpu_custom_call.1} parent=1 // pred_check_branch
      %730 = sbr.rel (0) target = $region37
    $region36: #{tpu_custom_call.1} parent=1 // pred_region
      %732 = dma.done [#allocation5], 256
    $region37: #{tpu_custom_call.1} parent=1 // pred_fallthru
      _
    %733 = vsyncpa [#allocation4], 1
    %734 = vsyncpa [#allocation7], 1
    %735 = vsyncpa [#allocation5], 1

</llo_original>
